<compile_context>
chip_gen: v7x
topology: tpu7x:2x2x1
jax: 0.10.0
libtpu: 0.0.40
codegen_flags: <defaults>
</compile_context>

<pallas_src>
from math import sqrt

import jax
import jax.numpy as jnp
import numpy as np
from jax.experimental import pallas as pl
from jax.experimental.pallas import tpu as pltpu

# ---- model hyper-parameters (small, consistent with the module) ------------
N_JOINTS = 8
D_EMB = 64                 # must be a multiple of 2*32 (GroupNorm num_groups=32)
N_GROUPS = 32
IN_F = N_JOINTS * 3        # (x, y, c) per joint
OUT_F = N_JOINTS * 3       # (x, y, z) per joint
OUT_PAD = 128              # lane-dense output width (unmasked stores / dense DMA)
EPS = 1e-5
INV_SQRT2 = 1.0 / sqrt(2.0)

TB_MAX = 512               # max batch tile (sweepable; amortizes per-step overhead)
TB_SPLIT = 128             # above 2*TB_SPLIT rows, aim for >= 2 grid steps (v7x: 2 TCs)


# ----------------------------- Pallas kernel --------------------------------
def pose_mlp_kernel(
    x_ref,
    w0_ref, g0_ref, b0_ref,
    w1a_ref, g1a_ref, b1a_ref, w1b_ref, g1b_ref, b1b_ref,
    w2a_ref, g2a_ref, b2a_ref, w2b_ref, g2b_ref, b2b_ref,
    wf_ref, bf_ref,
    out_ref,
):
    x = x_ref[...]

    def gn_relu(d, gamma, beta):
        # d already holds the signed half-difference of each channel's group
        # pair (GroupNorm group_size == 2 folded into the preceding weights):
        #   normalized_i = d_i * rsqrt(d_i^2 + eps)
        # rsqrt goes to the EUP slot; everything else is VPU elementwise.
        xn = d * jax.lax.rsqrt(d * d + EPS)
        return jnp.maximum(xn * gamma + beta, 0.0)

    # LinearLayer(in_features -> d_embedding)  [GN folded into w0]
    h = gn_relu(jnp.dot(x, w0_ref[...], preferred_element_type=jnp.float32),
                g0_ref[...], b0_ref[...])

    # ResidualLinearLayer #1
    r = gn_relu(jnp.dot(h, w1a_ref[...], preferred_element_type=jnp.float32),
                g1a_ref[...], b1a_ref[...])
    r = gn_relu(jnp.dot(r, w1b_ref[...], preferred_element_type=jnp.float32),
                g1b_ref[...], b1b_ref[...])
    h = (h + r) * INV_SQRT2

    # ResidualLinearLayer #2
    r = gn_relu(jnp.dot(h, w2a_ref[...], preferred_element_type=jnp.float32),
                g2a_ref[...], b2a_ref[...])
    r = gn_relu(jnp.dot(r, w2b_ref[...], preferred_element_type=jnp.float32),
                g2b_ref[...], b2b_ref[...])
    h = (h + r) * INV_SQRT2

    # Final Linear(d_embedding -> 128-lane padded out), with bias
    out = jnp.dot(h, wf_ref[...], preferred_element_type=jnp.float32) + bf_ref[...]
    out_ref[...] = out.astype(out_ref.dtype)


# ------------------------------ JAX glue -------------------------------------
def scale_by_width(p, resolution):
    # p: (..., J, 2, 1), resolution: (..., 2)
    x = p[..., 0:1, :]
    y = p[..., 1:2, :]
    w = resolution[..., 0:1][..., None, None, :]
    h = resolution[..., 1:2][..., None, None, :]
    x = (2.0 * x - w) / w
    y = (2.0 * y - h) / w
    return jnp.concatenate([x, y], axis=-2)


def _round_up(n, m):
    return ((n + m - 1) // m) * m


def _choose_tb(n):
    """Batch tile: big enough to amortize per-step overhead, >=2 steps on v7x."""
    n8 = _round_up(max(n, 1), 8)
    if n8 <= 2 * TB_SPLIT:
        return n8                              # one tile, whole (padded) batch
    return min(TB_MAX, _round_up(pl.cdiv(n8, 2), 8))


def _fold_gn_pairs(w):
    """Return W' = W @ D with D[i,i]=0.5, D[i^1,i]=-0.5 (column-pair half-diff).

    For a bias-free Linear followed by GroupNorm with group_size == 2, the
    normalizer only needs d = (z_i - z_{i^1})/2, which equals x @ W'.  Exact
    algebra; computed once outside the kernel.
    """
    d_even = 0.5 * (w[:, 0::2] - w[:, 1::2])                 # (fi, 32)
    return jnp.stack([d_even, -d_even], axis=-1).reshape(w.shape)


def init_params(key):
    """Deterministic parameter init (shapes match the PyTorch module)."""
    def lin(k, fi, fo):
        bound = 1.0 / np.sqrt(fi)
        return jax.random.uniform(k, (fi, fo), jnp.float32, -bound, bound)

    keys = jax.random.split(key, 18)

    def affine(kg, kb):
        # PyTorch default is gamma=1, beta=0; perturb slightly so the affine
        # path is actually exercised by the numerical check.
        g = 1.0 + 0.1 * jax.random.uniform(kg, (1, D_EMB), jnp.float32, -1.0, 1.0)
        b = 0.1 * jax.random.uniform(kb, (1, D_EMB), jnp.float32, -1.0, 1.0)
        return g, b

    g0, b0 = affine(keys[7], keys[8])
    g1a, b1a = affine(keys[9], keys[10])
    g1b, b1b = affine(keys[11], keys[12])
    g2a, b2a = affine(keys[13], keys[14])
    g2b, b2b = affine(keys[15], keys[16])

    params = {
        "w0": lin(keys[0], IN_F, D_EMB),  "g0": g0,  "b0": b0,
        "w1a": lin(keys[1], D_EMB, D_EMB), "g1a": g1a, "b1a": b1a,
        "w1b": lin(keys[2], D_EMB, D_EMB), "g1b": g1b, "b1b": b1b,
        "w2a": lin(keys[3], D_EMB, D_EMB), "g2a": g2a, "b2a": b2a,
        "w2b": lin(keys[4], D_EMB, D_EMB), "g2b": g2b, "b2b": b2b,
        "wf": lin(keys[5], D_EMB, OUT_F),
        "bf": jax.random.uniform(keys[6], (1, OUT_F), jnp.float32,
                                 -1.0 / np.sqrt(D_EMB), 1.0 / np.sqrt(D_EMB)),
    }
    return params


def _full_spec(arr):
    # full-array block, resident (constant index_map) for every grid step
    nd = arr.ndim
    return pl.BlockSpec(arr.shape, lambda i, _nd=nd: (0,) * _nd)


def pose2d_to_pose3d(p, c, resolution, params):
    # preprocessing (glue): scale, concat confidences, flatten per-sample
    p_s = scale_by_width(p, resolution)                 # (..., J, 2, 1)
    x = jnp.concatenate([p_s, c], axis=-2)              # (..., J, 3, 1)
    x = x.reshape(-1, IN_F).astype(jnp.float32)         # (N, J*3)

    n = x.shape[0]
    tb = _choose_tb(n)
    n_pad = _round_up(n, tb)
    x_pad = jnp.pad(x, ((0, n_pad - n), (0, 0)))

    # Fold the GroupNorm pair-difference into every hidden-layer weight.
    w0 = _fold_gn_pairs(params["w0"])
    w1a = _fold_gn_pairs(params["w1a"])
    w1b = _fold_gn_pairs(params["w1b"])
    w2a = _fold_gn_pairs(params["w2a"])
    w2b = _fold_gn_pairs(params["w2b"])

    # Lane-dense output: pad final weight/bias to 128 lanes (extra cols are 0).
    wf = jnp.zeros((D_EMB, OUT_PAD), jnp.float32).at[:, :OUT_F].set(params["wf"])
    bf = jnp.zeros((1, OUT_PAD), jnp.float32).at[:, :OUT_F].set(params["bf"])

    weights = [
        w0, params["g0"], params["b0"],
        w1a, params["g1a"], params["b1a"], w1b, params["g1b"], params["b1b"],
        w2a, params["g2a"], params["b2a"], w2b, params["g2b"], params["b2b"],
        wf, bf,
    ]

    grid = (n_pad // tb,)
    flops = int(2 * n_pad * (IN_F * D_EMB + 4 * D_EMB * D_EMB + D_EMB * OUT_PAD))
    bytes_accessed = int(4 * (n_pad * (IN_F + OUT_PAD)
                              + sum(int(np.prod(w.shape)) for w in weights)))
    transcendentals = int(5 * n_pad * D_EMB)             # one rsqrt per GN channel

    out = pl.pallas_call(
        pose_mlp_kernel,
        out_shape=jax.ShapeDtypeStruct((n_pad, OUT_PAD), jnp.float32),
        grid_spec=pltpu.PrefetchScalarGridSpec(
            num_scalar_prefetch=0,
            grid=grid,
            in_specs=[pl.BlockSpec((tb, IN_F), lambda i: (i, 0))]
                     + [_full_spec(w) for w in weights],
            out_specs=pl.BlockSpec((tb, OUT_PAD), lambda i: (i, 0)),
        ),
        compiler_params=pltpu.CompilerParams(
            dimension_semantics=("parallel",)),
        cost_estimate=pl.CostEstimate(
            flops=flops,
            transcendentals=transcendentals,
            bytes_accessed=bytes_accessed),
    )(x_pad, *weights)

    out = out[:n, :OUT_F]
    return out.reshape((-1, N_JOINTS, 3, 1))


# --------------------------- pure-JAX reference ------------------------------
def _ref_gn_relu(h, gamma, beta):
    # Faithful PyTorch GroupNorm: centered mean/var per group (biased var).
    gs = D_EMB // N_GROUPS
    hg = h.reshape(h.shape[0], N_GROUPS, gs)
    mu = hg.mean(axis=-1, keepdims=True)
    var = jnp.mean((hg - mu) ** 2, axis=-1, keepdims=True)
    hn = ((hg - mu) / jnp.sqrt(var + EPS)).reshape(h.shape)
    return jnp.maximum(hn * gamma + beta, 0.0)


def reference_forward(p, c, resolution, params):
    p_s = scale_by_width(p, resolution)
    x = jnp.concatenate([p_s, c], axis=-2).reshape(-1, IN_F)
    h = _ref_gn_relu(x @ params["w0"], params["g0"], params["b0"])
    r = _ref_gn_relu(h @ params["w1a"], params["g1a"], params["b1a"])
    r = _ref_gn_relu(r @ params["w1b"], params["g1b"], params["b1b"])
    h = (h + r) * INV_SQRT2
    r = _ref_gn_relu(h @ params["w2a"], params["g2a"], params["b2a"])
    r = _ref_gn_relu(r @ params["w2b"], params["g2b"], params["b2b"])
    h = (h + r) * INV_SQRT2
    out = h @ params["wf"] + params["bf"]
    return out.reshape((-1, N_JOINTS, 3, 1))


# ---------------------------------- main -------------------------------------
if __name__ == "__main__":
    key = jax.random.PRNGKey(0)
    kp, kc, kparams = jax.random.split(key, 3)

    batch = 13   # odd on purpose: exercises the row-padding / slicing path
    # pixel coords in [0, 480), confidences in [0, 1), fixed resolution
    p = jax.random.uniform(kp, (batch, N_JOINTS, 2, 1), jnp.float32, 0.0, 480.0)
    c = jax.random.uniform(kc, (batch, N_JOINTS, 1, 1), jnp.float32, 0.0, 1.0)
    resolution = jnp.tile(jnp.array([[640.0, 480.0]], jnp.float32), (batch, 1))

    params = init_params(kparams)

    out = pose2d_to_pose3d(p, c, resolution, params)
    out = jax.block_until_ready(out)

    ref = reference_forward(p, c, resolution, params)
    np.testing.assert_allclose(np.asarray(out), np.asarray(ref), rtol=1e-3, atol=1e-3)
    assert out.shape == (batch, N_JOINTS, 3, 1)

    # TODO(synk): Dropout is treated as identity (eval mode); training-mode
    # dropout would need pltpu.prng_seed/prng_random_bits in-kernel.
    print("KERNEL_OK")
</pallas_src>

<mosaic_0001>
module attributes {stable_mosaic.version = 11 : i64} {
  func.func @pose_mlp_kernel(%arg0: i32, %arg1: memref<16x24xf32, #tpu.memory_space<vmem>>, %arg2: memref<24x64xf32, #tpu.memory_space<vmem>>, %arg3: memref<1x64xf32, #tpu.memory_space<vmem>>, %arg4: memref<1x64xf32, #tpu.memory_space<vmem>>, %arg5: memref<64x64xf32, #tpu.memory_space<vmem>>, %arg6: memref<1x64xf32, #tpu.memory_space<vmem>>, %arg7: memref<1x64xf32, #tpu.memory_space<vmem>>, %arg8: memref<64x64xf32, #tpu.memory_space<vmem>>, %arg9: memref<1x64xf32, #tpu.memory_space<vmem>>, %arg10: memref<1x64xf32, #tpu.memory_space<vmem>>, %arg11: memref<64x64xf32, #tpu.memory_space<vmem>>, %arg12: memref<1x64xf32, #tpu.memory_space<vmem>>, %arg13: memref<1x64xf32, #tpu.memory_space<vmem>>, %arg14: memref<64x64xf32, #tpu.memory_space<vmem>>, %arg15: memref<1x64xf32, #tpu.memory_space<vmem>>, %arg16: memref<1x64xf32, #tpu.memory_space<vmem>>, %arg17: memref<64x128xf32, #tpu.memory_space<vmem>>, %arg18: memref<1x128xf32, #tpu.memory_space<vmem>>, %arg19: memref<16x128xf32, #tpu.memory_space<vmem>>) attributes {dimension_semantics = [#tpu.dimension_semantics<parallel>], iteration_bounds = array<i64: 1>, scalar_prefetch = 0 : i64, scratch_operands = 0 : i64, tpu.core_type = #tpu.core_type<tc>, window_params = [{transform_indices = @transform_0, window_bounds = array<i64: 16, 24>}, {pipeline_mode = #tpu.pipeline_mode<synchronous>, transform_indices = @transform_1, window_bounds = array<i64: 24, 64>}, {pipeline_mode = #tpu.pipeline_mode<synchronous>, transform_indices = @transform_2, window_bounds = array<i64: 1, 64>}, {pipeline_mode = #tpu.pipeline_mode<synchronous>, transform_indices = @transform_3, window_bounds = array<i64: 1, 64>}, {pipeline_mode = #tpu.pipeline_mode<synchronous>, transform_indices = @transform_4, window_bounds = array<i64: 64, 64>}, {pipeline_mode = #tpu.pipeline_mode<synchronous>, transform_indices = @transform_5, window_bounds = array<i64: 1, 64>}, {pipeline_mode = #tpu.pipeline_mode<synchronous>, transform_indices = @transform_6, window_bounds = array<i64: 1, 64>}, {pipeline_mode = #tpu.pipeline_mode<synchronous>, transform_indices = @transform_7, window_bounds = array<i64: 64, 64>}, {pipeline_mode = #tpu.pipeline_mode<synchronous>, transform_indices = @transform_8, window_bounds = array<i64: 1, 64>}, {pipeline_mode = #tpu.pipeline_mode<synchronous>, transform_indices = @transform_9, window_bounds = array<i64: 1, 64>}, {pipeline_mode = #tpu.pipeline_mode<synchronous>, transform_indices = @transform_10, window_bounds = array<i64: 64, 64>}, {pipeline_mode = #tpu.pipeline_mode<synchronous>, transform_indices = @transform_11, window_bounds = array<i64: 1, 64>}, {pipeline_mode = #tpu.pipeline_mode<synchronous>, transform_indices = @transform_12, window_bounds = array<i64: 1, 64>}, {pipeline_mode = #tpu.pipeline_mode<synchronous>, transform_indices = @transform_13, window_bounds = array<i64: 64, 64>}, {pipeline_mode = #tpu.pipeline_mode<synchronous>, transform_indices = @transform_14, window_bounds = array<i64: 1, 64>}, {pipeline_mode = #tpu.pipeline_mode<synchronous>, transform_indices = @transform_15, window_bounds = array<i64: 1, 64>}, {pipeline_mode = #tpu.pipeline_mode<synchronous>, transform_indices = @transform_16, window_bounds = array<i64: 64, 128>}, {pipeline_mode = #tpu.pipeline_mode<synchronous>, transform_indices = @transform_17, window_bounds = array<i64: 1, 128>}, {transform_indices = @transform_18, window_bounds = array<i64: 16, 128>}]} {
    %c0 = arith.constant 0 : index
    %c0_0 = arith.constant 0 : index
    %0 = vector.load %arg1[%c0, %c0_0] : memref<16x24xf32, #tpu.memory_space<vmem>>, vector<16x24xf32>
    %c0_1 = arith.constant 0 : index
    %c0_2 = arith.constant 0 : index
    %1 = vector.load %arg2[%c0_1, %c0_2] : memref<24x64xf32, #tpu.memory_space<vmem>>, vector<24x64xf32>
    %cst = arith.constant dense<0.000000e+00> : vector<16x64xf32>
    %2 = tpu.matmul %0, %1, %cst {dimension_numbers = #tpu.dot_dimension_numbers<[1], [0], [0], [1], [0, 0, 1, 1], [], []>} : vector<16x24xf32>, vector<24x64xf32>, vector<16x64xf32> -> vector<16x64xf32>
    %c0_3 = arith.constant 0 : index
    %c0_4 = arith.constant 0 : index
    %3 = vector.load %arg3[%c0_3, %c0_4] : memref<1x64xf32, #tpu.memory_space<vmem>>, vector<1x64xf32>
    %c0_5 = arith.constant 0 : index
    %c0_6 = arith.constant 0 : index
    %4 = vector.load %arg4[%c0_5, %c0_6] : memref<1x64xf32, #tpu.memory_space<vmem>>, vector<1x64xf32>
    %5 = arith.mulf %2, %2 : vector<16x64xf32>
    %cst_7 = arith.constant 9.99999974E-6 : f32
    %6 = vector.broadcast %cst_7 : f32 to vector<16x64xf32>
    %7 = arith.addf %5, %6 : vector<16x64xf32>
    %8 = math.rsqrt %7 : vector<16x64xf32>
    %9 = arith.mulf %2, %8 : vector<16x64xf32>
    %10 = vector.broadcast %3 : vector<1x64xf32> to vector<16x64xf32>
    %11 = arith.mulf %9, %10 : vector<16x64xf32>
    %12 = vector.broadcast %4 : vector<1x64xf32> to vector<16x64xf32>
    %13 = arith.addf %11, %12 : vector<16x64xf32>
    %cst_8 = arith.constant 0.000000e+00 : f32
    %14 = vector.broadcast %cst_8 : f32 to vector<16x64xf32>
    %15 = arith.maximumf %13, %14 : vector<16x64xf32>
    %c0_9 = arith.constant 0 : index
    %c0_10 = arith.constant 0 : index
    %16 = vector.load %arg5[%c0_9, %c0_10] : memref<64x64xf32, #tpu.memory_space<vmem>>, vector<64x64xf32>
    %cst_11 = arith.constant dense<0.000000e+00> : vector<16x64xf32>
    %17 = tpu.matmul %15, %16, %cst_11 {dimension_numbers = #tpu.dot_dimension_numbers<[1], [0], [0], [1], [0, 0, 1, 1], [], []>} : vector<16x64xf32>, vector<64x64xf32>, vector<16x64xf32> -> vector<16x64xf32>
    %c0_12 = arith.constant 0 : index
    %c0_13 = arith.constant 0 : index
    %18 = vector.load %arg6[%c0_12, %c0_13] : memref<1x64xf32, #tpu.memory_space<vmem>>, vector<1x64xf32>
    %c0_14 = arith.constant 0 : index
    %c0_15 = arith.constant 0 : index
    %19 = vector.load %arg7[%c0_14, %c0_15] : memref<1x64xf32, #tpu.memory_space<vmem>>, vector<1x64xf32>
    %20 = arith.mulf %17, %17 : vector<16x64xf32>
    %cst_16 = arith.constant 9.99999974E-6 : f32
    %21 = vector.broadcast %cst_16 : f32 to vector<16x64xf32>
    %22 = arith.addf %20, %21 : vector<16x64xf32>
    %23 = math.rsqrt %22 : vector<16x64xf32>
    %24 = arith.mulf %17, %23 : vector<16x64xf32>
    %25 = vector.broadcast %18 : vector<1x64xf32> to vector<16x64xf32>
    %26 = arith.mulf %24, %25 : vector<16x64xf32>
    %27 = vector.broadcast %19 : vector<1x64xf32> to vector<16x64xf32>
    %28 = arith.addf %26, %27 : vector<16x64xf32>
    %cst_17 = arith.constant 0.000000e+00 : f32
    %29 = vector.broadcast %cst_17 : f32 to vector<16x64xf32>
    %30 = arith.maximumf %28, %29 : vector<16x64xf32>
    %c0_18 = arith.constant 0 : index
    %c0_19 = arith.constant 0 : index
    %31 = vector.load %arg8[%c0_18, %c0_19] : memref<64x64xf32, #tpu.memory_space<vmem>>, vector<64x64xf32>
    %cst_20 = arith.constant dense<0.000000e+00> : vector<16x64xf32>
    %32 = tpu.matmul %30, %31, %cst_20 {dimension_numbers = #tpu.dot_dimension_numbers<[1], [0], [0], [1], [0, 0, 1, 1], [], []>} : vector<16x64xf32>, vector<64x64xf32>, vector<16x64xf32> -> vector<16x64xf32>
    %c0_21 = arith.constant 0 : index
    %c0_22 = arith.constant 0 : index
    %33 = vector.load %arg9[%c0_21, %c0_22] : memref<1x64xf32, #tpu.memory_space<vmem>>, vector<1x64xf32>
    %c0_23 = arith.constant 0 : index
    %c0_24 = arith.constant 0 : index
    %34 = vector.load %arg10[%c0_23, %c0_24] : memref<1x64xf32, #tpu.memory_space<vmem>>, vector<1x64xf32>
    %35 = arith.mulf %32, %32 : vector<16x64xf32>
    %cst_25 = arith.constant 9.99999974E-6 : f32
    %36 = vector.broadcast %cst_25 : f32 to vector<16x64xf32>
    %37 = arith.addf %35, %36 : vector<16x64xf32>
    %38 = math.rsqrt %37 : vector<16x64xf32>
    %39 = arith.mulf %32, %38 : vector<16x64xf32>
    %40 = vector.broadcast %33 : vector<1x64xf32> to vector<16x64xf32>
    %41 = arith.mulf %39, %40 : vector<16x64xf32>
    %42 = vector.broadcast %34 : vector<1x64xf32> to vector<16x64xf32>
    %43 = arith.addf %41, %42 : vector<16x64xf32>
    %cst_26 = arith.constant 0.000000e+00 : f32
    %44 = vector.broadcast %cst_26 : f32 to vector<16x64xf32>
    %45 = arith.maximumf %43, %44 : vector<16x64xf32>
    %46 = arith.addf %15, %45 : vector<16x64xf32>
    %cst_27 = arith.constant 0.707106769 : f32
    %47 = vector.broadcast %cst_27 : f32 to vector<16x64xf32>
    %48 = arith.mulf %46, %47 : vector<16x64xf32>
    %c0_28 = arith.constant 0 : index
    %c0_29 = arith.constant 0 : index
    %49 = vector.load %arg11[%c0_28, %c0_29] : memref<64x64xf32, #tpu.memory_space<vmem>>, vector<64x64xf32>
    %cst_30 = arith.constant dense<0.000000e+00> : vector<16x64xf32>
    %50 = tpu.matmul %48, %49, %cst_30 {dimension_numbers = #tpu.dot_dimension_numbers<[1], [0], [0], [1], [0, 0, 1, 1], [], []>} : vector<16x64xf32>, vector<64x64xf32>, vector<16x64xf32> -> vector<16x64xf32>
    %c0_31 = arith.constant 0 : index
    %c0_32 = arith.constant 0 : index
    %51 = vector.load %arg12[%c0_31, %c0_32] : memref<1x64xf32, #tpu.memory_space<vmem>>, vector<1x64xf32>
    %c0_33 = arith.constant 0 : index
    %c0_34 = arith.constant 0 : index
    %52 = vector.load %arg13[%c0_33, %c0_34] : memref<1x64xf32, #tpu.memory_space<vmem>>, vector<1x64xf32>
    %53 = arith.mulf %50, %50 : vector<16x64xf32>
    %cst_35 = arith.constant 9.99999974E-6 : f32
    %54 = vector.broadcast %cst_35 : f32 to vector<16x64xf32>
    %55 = arith.addf %53, %54 : vector<16x64xf32>
    %56 = math.rsqrt %55 : vector<16x64xf32>
    %57 = arith.mulf %50, %56 : vector<16x64xf32>
    %58 = vector.broadcast %51 : vector<1x64xf32> to vector<16x64xf32>
    %59 = arith.mulf %57, %58 : vector<16x64xf32>
    %60 = vector.broadcast %52 : vector<1x64xf32> to vector<16x64xf32>
    %61 = arith.addf %59, %60 : vector<16x64xf32>
    %cst_36 = arith.constant 0.000000e+00 : f32
    %62 = vector.broadcast %cst_36 : f32 to vector<16x64xf32>
    %63 = arith.maximumf %61, %62 : vector<16x64xf32>
    %c0_37 = arith.constant 0 : index
    %c0_38 = arith.constant 0 : index
    %64 = vector.load %arg14[%c0_37, %c0_38] : memref<64x64xf32, #tpu.memory_space<vmem>>, vector<64x64xf32>
    %cst_39 = arith.constant dense<0.000000e+00> : vector<16x64xf32>
    %65 = tpu.matmul %63, %64, %cst_39 {dimension_numbers = #tpu.dot_dimension_numbers<[1], [0], [0], [1], [0, 0, 1, 1], [], []>} : vector<16x64xf32>, vector<64x64xf32>, vector<16x64xf32> -> vector<16x64xf32>
    %c0_40 = arith.constant 0 : index
    %c0_41 = arith.constant 0 : index
    %66 = vector.load %arg15[%c0_40, %c0_41] : memref<1x64xf32, #tpu.memory_space<vmem>>, vector<1x64xf32>
    %c0_42 = arith.constant 0 : index
    %c0_43 = arith.constant 0 : index
    %67 = vector.load %arg16[%c0_42, %c0_43] : memref<1x64xf32, #tpu.memory_space<vmem>>, vector<1x64xf32>
    %68 = arith.mulf %65, %65 : vector<16x64xf32>
    %cst_44 = arith.constant 9.99999974E-6 : f32
    %69 = vector.broadcast %cst_44 : f32 to vector<16x64xf32>
    %70 = arith.addf %68, %69 : vector<16x64xf32>
    %71 = math.rsqrt %70 : vector<16x64xf32>
    %72 = arith.mulf %65, %71 : vector<16x64xf32>
    %73 = vector.broadcast %66 : vector<1x64xf32> to vector<16x64xf32>
    %74 = arith.mulf %72, %73 : vector<16x64xf32>
    %75 = vector.broadcast %67 : vector<1x64xf32> to vector<16x64xf32>
    %76 = arith.addf %74, %75 : vector<16x64xf32>
    %cst_45 = arith.constant 0.000000e+00 : f32
    %77 = vector.broadcast %cst_45 : f32 to vector<16x64xf32>
    %78 = arith.maximumf %76, %77 : vector<16x64xf32>
    %79 = arith.addf %48, %78 : vector<16x64xf32>
    %cst_46 = arith.constant 0.707106769 : f32
    %80 = vector.broadcast %cst_46 : f32 to vector<16x64xf32>
    %81 = arith.mulf %79, %80 : vector<16x64xf32>
    %c0_47 = arith.constant 0 : index
    %c0_48 = arith.constant 0 : index
    %82 = vector.load %arg17[%c0_47, %c0_48] : memref<64x128xf32, #tpu.memory_space<vmem>>, vector<64x128xf32>
    %cst_49 = arith.constant dense<0.000000e+00> : vector<16x128xf32>
    %83 = tpu.matmul %81, %82, %cst_49 {dimension_numbers = #tpu.dot_dimension_numbers<[1], [0], [0], [1], [0, 0, 1, 1], [], []>} : vector<16x64xf32>, vector<64x128xf32>, vector<16x128xf32> -> vector<16x128xf32>
    %c0_50 = arith.constant 0 : index
    %c0_51 = arith.constant 0 : index
    %84 = vector.load %arg18[%c0_50, %c0_51] : memref<1x128xf32, #tpu.memory_space<vmem>>, vector<1x128xf32>
    %85 = vector.broadcast %84 : vector<1x128xf32> to vector<16x128xf32>
    %86 = arith.addf %83, %85 : vector<16x128xf32>
    %c0_52 = arith.constant 0 : index
    %c0_53 = arith.constant 0 : index
    %87 = vector.load %arg19[%c0_52, %c0_53] : memref<16x128xf32, #tpu.memory_space<vmem>>, vector<16x128xf32>
    tpu.vector_store %arg19[%c0_52, %c0_53], %86 {strides = array<i32>} : memref<16x128xf32, #tpu.memory_space<vmem>>, vector<16x128xf32>,
    return
  }
  func.func @transform_0(%arg0: i32) -> (i32, i32) {
    %c0_i32 = arith.constant 0 : i32
    %c0_i32_0 = arith.constant 0 : i32
    return %arg0, %c0_i32 : i32, i32
  }
  func.func @transform_1(%arg0: i32) -> (i32, i32) {
    %c0_i32 = arith.constant 0 : i32
    %c0_i32_0 = arith.constant 0 : i32
    %c0_i32_1 = arith.constant 0 : i32
    return %c0_i32, %c0_i32_0 : i32, i32
  }
  func.func @transform_2(%arg0: i32) -> (i32, i32) {
    %c0_i32 = arith.constant 0 : i32
    %c0_i32_0 = arith.constant 0 : i32
    %c0_i32_1 = arith.constant 0 : i32
    return %c0_i32, %c0_i32_0 : i32, i32
  }
  func.func @transform_3(%arg0: i32) -> (i32, i32) {
    %c0_i32 = arith.constant 0 : i32
    %c0_i32_0 = arith.constant 0 : i32
    %c0_i32_1 = arith.constant 0 : i32
    return %c0_i32, %c0_i32_0 : i32, i32
  }
  func.func @transform_4(%arg0: i32) -> (i32, i32) {
    %c0_i32 = arith.constant 0 : i32
    %c0_i32_0 = arith.constant 0 : i32
    %c0_i32_1 = arith.constant 0 : i32
    return %c0_i32, %c0_i32_0 : i32, i32
  }
  func.func @transform_5(%arg0: i32) -> (i32, i32) {
    %c0_i32 = arith.constant 0 : i32
    %c0_i32_0 = arith.constant 0 : i32
    %c0_i32_1 = arith.constant 0 : i32
    return %c0_i32, %c0_i32_0 : i32, i32
  }
  func.func @transform_6(%arg0: i32) -> (i32, i32) {
    %c0_i32 = arith.constant 0 : i32
    %c0_i32_0 = arith.constant 0 : i32
    %c0_i32_1 = arith.constant 0 : i32
    return %c0_i32, %c0_i32_0 : i32, i32
  }
  func.func @transform_7(%arg0: i32) -> (i32, i32) {
    %c0_i32 = arith.constant 0 : i32
    %c0_i32_0 = arith.constant 0 : i32
    %c0_i32_1 = arith.constant 0 : i32
    return %c0_i32, %c0_i32_0 : i32, i32
  }
  func.func @transform_8(%arg0: i32) -> (i32, i32) {
    %c0_i32 = arith.constant 0 : i32
    %c0_i32_0 = arith.constant 0 : i32
    %c0_i32_1 = arith.constant 0 : i32
    return %c0_i32, %c0_i32_0 : i32, i32
  }
  func.func @transform_9(%arg0: i32) -> (i32, i32) {
    %c0_i32 = arith.constant 0 : i32
    %c0_i32_0 = arith.constant 0 : i32
    %c0_i32_1 = arith.constant 0 : i32
    return %c0_i32, %c0_i32_0 : i32, i32
  }
  func.func @transform_10(%arg0: i32) -> (i32, i32) {
    %c0_i32 = arith.constant 0 : i32
    %c0_i32_0 = arith.constant 0 : i32
    %c0_i32_1 = arith.constant 0 : i32
    return %c0_i32, %c0_i32_0 : i32, i32
  }
  func.func @transform_11(%arg0: i32) -> (i32, i32) {
    %c0_i32 = arith.constant 0 : i32
    %c0_i32_0 = arith.constant 0 : i32
    %c0_i32_1 = arith.constant 0 : i32
    return %c0_i32, %c0_i32_0 : i32, i32
  }
  func.func @transform_12(%arg0: i32) -> (i32, i32) {
    %c0_i32 = arith.constant 0 : i32
    %c0_i32_0 = arith.constant 0 : i32
    %c0_i32_1 = arith.constant 0 : i32
    return %c0_i32, %c0_i32_0 : i32, i32
  }
  func.func @transform_13(%arg0: i32) -> (i32, i32) {
    %c0_i32 = arith.constant 0 : i32
    %c0_i32_0 = arith.constant 0 : i32
    %c0_i32_1 = arith.constant 0 : i32
    return %c0_i32, %c0_i32_0 : i32, i32
  }
  func.func @transform_14(%arg0: i32) -> (i32, i32) {
    %c0_i32 = arith.constant 0 : i32
    %c0_i32_0 = arith.constant 0 : i32
    %c0_i32_1 = arith.constant 0 : i32
    return %c0_i32, %c0_i32_0 : i32, i32
  }
  func.func @transform_15(%arg0: i32) -> (i32, i32) {
    %c0_i32 = arith.constant 0 : i32
    %c0_i32_0 = arith.constant 0 : i32
    %c0_i32_1 = arith.constant 0 : i32
    return %c0_i32, %c0_i32_0 : i32, i32
  }
  func.func @transform_16(%arg0: i32) -> (i32, i32) {
    %c0_i32 = arith.constant 0 : i32
    %c0_i32_0 = arith.constant 0 : i32
    %c0_i32_1 = arith.constant 0 : i32
    return %c0_i32, %c0_i32_0 : i32, i32
  }
  func.func @transform_17(%arg0: i32) -> (i32, i32) {
    %c0_i32 = arith.constant 0 : i32
    %c0_i32_0 = arith.constant 0 : i32
    %c0_i32_1 = arith.constant 0 : i32
    return %c0_i32, %c0_i32_0 : i32, i32
  }
  func.func @transform_18(%arg0: i32) -> (i32, i32) {
    %c0_i32 = arith.constant 0 : i32
    %c0_i32_0 = arith.constant 0 : i32
    return %arg0, %c0_i32 : i32, i32
  }
}

</mosaic_0001>

<llo_original>
// kernel: tpu_custom_call.1
$region0: #{tpu_custom_call.1}
  #allocation0 [shape = 'u32[]', space=smem, size = 0x4, offset = 0x4, fixed_abs, tag = 'smem constant byte address 0x4 - core index']
  #allocation1 [shape = 'u32[144,128]{1,0:T(1,128)}', space=vmem, size = 0x12000, scoped, tag = 'internal scratch']
  %s0 = inlined_call_operand.hbm [shape: f32[16,24], index: 0, kind: input, shape index: {}]
  %s1 = inlined_call_operand.hbm [shape: f32[24,64], index: 1, kind: input, shape index: {}]
  %s2 = inlined_call_operand.vmem [shape: f32[1,64], index: 2, kind: input, shape index: {}]
  %s3 = inlined_call_operand.vmem [shape: f32[1,64], index: 3, kind: input, shape index: {}]
  %s4 = inlined_call_operand.hbm [shape: f32[64,64], index: 4, kind: input, shape index: {}]
  %s5 = inlined_call_operand.vmem [shape: f32[1,64], index: 5, kind: input, shape index: {}]
  %s6 = inlined_call_operand.vmem [shape: f32[1,64], index: 6, kind: input, shape index: {}]
  %s7 = inlined_call_operand.hbm [shape: f32[64,64], index: 7, kind: input, shape index: {}]
  %s8 = inlined_call_operand.vmem [shape: f32[1,64], index: 8, kind: input, shape index: {}]
  %s9 = inlined_call_operand.vmem [shape: f32[1,64], index: 9, kind: input, shape index: {}]
  %s10 = inlined_call_operand.hbm [shape: f32[64,64], index: 10, kind: input, shape index: {}]
  %s11 = inlined_call_operand.vmem [shape: f32[1,64], index: 11, kind: input, shape index: {}]
  %s12 = inlined_call_operand.vmem [shape: f32[1,64], index: 12, kind: input, shape index: {}]
  %s13 = inlined_call_operand.hbm [shape: f32[64,64], index: 13, kind: input, shape index: {}]
  %s14 = inlined_call_operand.vmem [shape: f32[1,64], index: 14, kind: input, shape index: {}]
  %s15 = inlined_call_operand.vmem [shape: f32[1,64], index: 15, kind: input, shape index: {}]
  %s16 = inlined_call_operand.hbm [shape: f32[64,128], index: 16, kind: input, shape index: {}]
  %s17 = inlined_call_operand.vmem [shape: f32[1,128], index: 17, kind: input, shape index: {}]
  %s18 = inlined_call_operand.hbm [shape: f32[16,128], index: 18, kind: output, shape index: {}]
  %s19 = sld [smem:[#allocation0]]
  $region110: #{tpu_custom_call.1} parent=0
    _
  %s21 = ssub.s32 1, %s19
  %s22 = scalar_select 0, %s21, %s19
  $region1: #{tpu_custom_call.1} parent=0
    #allocation2 [shape = 'u8[8192]{0}', space=vmem, size = 0x2000, scoped, tag = 'input window, operand 0, single buffered']
    #allocation3 [shape = 's32[1]{0}', space=sflag, size = 0x4, scoped, tag = 'scoped memory for tpu_custom_call.1']
    #allocation4 [shape = 's32[1]{0}', space=sflag, size = 0x4, scoped, tag = 'scoped memory for tpu_custom_call.1']
    #allocation5 [shape = 'u8[12288]{0}', space=vmem, size = 0x3000, scoped, tag = 'input window, operand 1, single buffered']
    #allocation6 [shape = 's32[1]{0}', space=sflag, size = 0x4, scoped, tag = 'scoped memory for tpu_custom_call.1']
    #allocation7 [shape = 'u8[32768]{0}', space=vmem, size = 0x8000, scoped, tag = 'input window, operand 4, single buffered']
    #allocation8 [shape = 'u8[32768]{0}', space=vmem, size = 0x8000, scoped, tag = 'input window, operand 7, single buffered']
    #allocation9 [shape = 's32[1]{0}', space=sflag, size = 0x4, scoped, tag = 'scoped memory for tpu_custom_call.1']
    #allocation10 [shape = 'u8[32768]{0}', space=vmem, size = 0x8000, scoped, tag = 'input window, operand 10, single buffered']
    #allocation11 [shape = 'u8[32768]{0}', space=vmem, size = 0x8000, scoped, tag = 'input window, operand 13, single buffered']
    #allocation12 [shape = 's32[1]{0}', space=sflag, size = 0x4, scoped, tag = 'scoped memory for tpu_custom_call.1']
    #allocation13 [shape = 'u8[32768]{0}', space=vmem, size = 0x8000, scoped, tag = 'input window, operand 16, single buffered']
    #allocation14 [shape = 'u8[8192]{0}', space=vmem, size = 0x2000, scoped, tag = 'output window, operand 0, single buffered']
    %23 = vsyncpa [#allocation3], 0
    %24 = vsyncpa [#allocation6], 0
    %25 = vsyncpa [#allocation9], 0
    %26 = vsyncpa [#allocation12], 0
    %27 = vsyncpa [#allocation4], 0
    // Predicated region
    $region2: #{tpu_custom_call.1} parent=1 // pred_check
      _
    $region3: #{tpu_custom_call.1} parent=1 // pred_check_branch
      %29 = sbr.rel (0) target = $region5
    $region4: #{tpu_custom_call.1} parent=1 // pred_region
      %s31 = ssub.s32 256, 256
      %32 = vsyncadd [#allocation3], %s31
      %s33 = sshll.u32 [#allocation2], 4
      %s34 = int_to_ptr.vmem [resolvable:$true] %s33
      %39 = dma.hbm_to_vmem [thread:$0]  %s0, 256, %s34, [#allocation3], 128, 128, 8
    $region5: #{tpu_custom_call.1} parent=1 // pred_fallthru
      _
    // Predicated region
    $region6: #{tpu_custom_call.1} parent=1 // pred_check
      _
    $region7: #{tpu_custom_call.1} parent=1 // pred_check_branch
      %41 = sbr.rel (0) target = $region9
    $region8: #{tpu_custom_call.1} parent=1 // pred_region
      %s43 = ssub.s32 384, 384
      %44 = vsyncadd [#allocation6], %s43
      %s45 = sshll.u32 [#allocation5], 4
      %s46 = int_to_ptr.vmem [resolvable:$true] %s45
      %51 = dma.hbm_to_vmem [thread:$0]  %s1, 384, %s46, [#allocation6], 128, 128, 8
    $region9: #{tpu_custom_call.1} parent=1 // pred_fallthru
      _
    // Predicated region
    $region10: #{tpu_custom_call.1} parent=1 // pred_check
      _
    $region11: #{tpu_custom_call.1} parent=1 // pred_check_branch
      %53 = sbr.rel (0) target = $region13
    $region12: #{tpu_custom_call.1} parent=1 // pred_region
      _
    $region13: #{tpu_custom_call.1} parent=1 // pred_fallthru
      _
    // Predicated region
    $region14: #{tpu_custom_call.1} parent=1 // pred_check
      _
    $region15: #{tpu_custom_call.1} parent=1 // pred_check_branch
      %55 = sbr.rel (0) target = $region17
    $region16: #{tpu_custom_call.1} parent=1 // pred_region
      _
    $region17: #{tpu_custom_call.1} parent=1 // pred_fallthru
      _
    // Predicated region
    $region18: #{tpu_custom_call.1} parent=1 // pred_check
      _
    $region19: #{tpu_custom_call.1} parent=1 // pred_check_branch
      %57 = sbr.rel (0) target = $region21
    $region20: #{tpu_custom_call.1} parent=1 // pred_region
      %s59 = ssub.s32 1024, 1024
      %60 = vsyncadd [#allocation6], %s59
      %s61 = sshll.u32 [#allocation7], 4
      %s62 = int_to_ptr.vmem [resolvable:$true] %s61
      %67 = dma.hbm_to_vmem [thread:$0]  %s4, 1024, %s62, [#allocation6], 128, 128, 8
    $region21: #{tpu_custom_call.1} parent=1 // pred_fallthru
      _
    // Predicated region
    $region22: #{tpu_custom_call.1} parent=1 // pred_check
      _
    $region23: #{tpu_custom_call.1} parent=1 // pred_check_branch
      %69 = sbr.rel (0) target = $region25
    $region24: #{tpu_custom_call.1} parent=1 // pred_region
      _
    $region25: #{tpu_custom_call.1} parent=1 // pred_fallthru
      _
    // Predicated region
    $region26: #{tpu_custom_call.1} parent=1 // pred_check
      _
    $region27: #{tpu_custom_call.1} parent=1 // pred_check_branch
      %71 = sbr.rel (0) target = $region29
    $region28: #{tpu_custom_call.1} parent=1 // pred_region
      _
    $region29: #{tpu_custom_call.1} parent=1 // pred_fallthru
      _
    // Predicated region
    $region30: #{tpu_custom_call.1} parent=1 // pred_check
      _
    $region31: #{tpu_custom_call.1} parent=1 // pred_check_branch
      %73 = sbr.rel (0) target = $region33
    $region32: #{tpu_custom_call.1} parent=1 // pred_region
      %s75 = ssub.s32 1024, 1024
      %76 = vsyncadd [#allocation9], %s75
      %s77 = sshll.u32 [#allocation8], 4
      %s78 = int_to_ptr.vmem [resolvable:$true] %s77
      %83 = dma.hbm_to_vmem [thread:$0]  %s7, 1024, %s78, [#allocation9], 128, 128, 8
    $region33: #{tpu_custom_call.1} parent=1 // pred_fallthru
      _
    // Predicated region
    $region34: #{tpu_custom_call.1} parent=1 // pred_check
      _
    $region35: #{tpu_custom_call.1} parent=1 // pred_check_branch
      %85 = sbr.rel (0) target = $region37
    $region36: #{tpu_custom_call.1} parent=1 // pred_region
      _
    $region37: #{tpu_custom_call.1} parent=1 // pred_fallthru
      _
    // Predicated region
    $region38: #{tpu_custom_call.1} parent=1 // pred_check
      _
    $region39: #{tpu_custom_call.1} parent=1 // pred_check_branch
      %87 = sbr.rel (0) target = $region41
    $region40: #{tpu_custom_call.1} parent=1 // pred_region
      _
    $region41: #{tpu_custom_call.1} parent=1 // pred_fallthru
      _
    // Predicated region
    $region42: #{tpu_custom_call.1} parent=1 // pred_check
      _
    $region43: #{tpu_custom_call.1} parent=1 // pred_check_branch
      %89 = sbr.rel (0) target = $region45
    $region44: #{tpu_custom_call.1} parent=1 // pred_region
      %s91 = ssub.s32 1024, 1024
      %92 = vsyncadd [#allocation9], %s91
      %s93 = sshll.u32 [#allocation10], 4
      %s94 = int_to_ptr.vmem [resolvable:$true] %s93
      %99 = dma.hbm_to_vmem [thread:$0]  %s10, 1024, %s94, [#allocation9], 128, 128, 8
    $region45: #{tpu_custom_call.1} parent=1 // pred_fallthru
      _
    // Predicated region
    $region46: #{tpu_custom_call.1} parent=1 // pred_check
      _
    $region47: #{tpu_custom_call.1} parent=1 // pred_check_branch
      %101 = sbr.rel (0) target = $region49
    $region48: #{tpu_custom_call.1} parent=1 // pred_region
      _
    $region49: #{tpu_custom_call.1} parent=1 // pred_fallthru
      _
    // Predicated region
    $region50: #{tpu_custom_call.1} parent=1 // pred_check
      _
    $region51: #{tpu_custom_call.1} parent=1 // pred_check_branch
      %103 = sbr.rel (0) target = $region53
    $region52: #{tpu_custom_call.1} parent=1 // pred_region
      _
    $region53: #{tpu_custom_call.1} parent=1 // pred_fallthru
      _
    // Predicated region
    $region54: #{tpu_custom_call.1} parent=1 // pred_check
      _
    $region55: #{tpu_custom_call.1} parent=1 // pred_check_branch
      %105 = sbr.rel (0) target = $region57
    $region56: #{tpu_custom_call.1} parent=1 // pred_region
      %s107 = ssub.s32 1024, 1024
      %108 = vsyncadd [#allocation12], %s107
      %s109 = sshll.u32 [#allocation11], 4
      %s110 = int_to_ptr.vmem [resolvable:$true] %s109
      %115 = dma.hbm_to_vmem [thread:$0]  %s13, 1024, %s110, [#allocation12], 128, 128, 8
    $region57: #{tpu_custom_call.1} parent=1 // pred_fallthru
      _
    // Predicated region
    $region58: #{tpu_custom_call.1} parent=1 // pred_check
      _
    $region59: #{tpu_custom_call.1} parent=1 // pred_check_branch
      %117 = sbr.rel (0) target = $region61
    $region60: #{tpu_custom_call.1} parent=1 // pred_region
      _
    $region61: #{tpu_custom_call.1} parent=1 // pred_fallthru
      _
    // Predicated region
    $region62: #{tpu_custom_call.1} parent=1 // pred_check
      _
    $region63: #{tpu_custom_call.1} parent=1 // pred_check_branch
      %119 = sbr.rel (0) target = $region65
    $region64: #{tpu_custom_call.1} parent=1 // pred_region
      _
    $region65: #{tpu_custom_call.1} parent=1 // pred_fallthru
      _
    // Predicated region
    $region66: #{tpu_custom_call.1} parent=1 // pred_check
      _
    $region67: #{tpu_custom_call.1} parent=1 // pred_check_branch
      %121 = sbr.rel (0) target = $region69
    $region68: #{tpu_custom_call.1} parent=1 // pred_region
      %s123 = ssub.s32 1024, 1024
      %124 = vsyncadd [#allocation12], %s123
      %s125 = sshll.u32 [#allocation13], 4
      %s126 = int_to_ptr.vmem [resolvable:$true] %s125
      %131 = dma.hbm_to_vmem [thread:$0]  %s16, 1024, %s126, [#allocation12], 128, 128, 8
    $region69: #{tpu_custom_call.1} parent=1 // pred_fallthru
      _
    // Predicated region
    $region70: #{tpu_custom_call.1} parent=1 // pred_check
      _
    $region71: #{tpu_custom_call.1} parent=1 // pred_check_branch
      %133 = sbr.rel (0) target = $region73
    $region72: #{tpu_custom_call.1} parent=1 // pred_region
      _
    $region73: #{tpu_custom_call.1} parent=1 // pred_fallthru
      _
    // Predicated region
    $region74: #{tpu_custom_call.1} parent=1 // pred_check
      _
    $region75: #{tpu_custom_call.1} parent=1 // pred_check_branch
      %135 = sbr.rel (0) target = $region77
    $region76: #{tpu_custom_call.1} parent=1 // pred_region
      %136 = dma.done [#allocation3], 256
    $region77: #{tpu_custom_call.1} parent=1 // pred_fallthru
      _
    // Predicated region
    $region78: #{tpu_custom_call.1} parent=1 // pred_check
      _
    $region79: #{tpu_custom_call.1} parent=1 // pred_check_branch
      %138 = sbr.rel (0) target = $region81
    $region80: #{tpu_custom_call.1} parent=1 // pred_region
      %139 = dma.done [#allocation6], 384
    $region81: #{tpu_custom_call.1} parent=1 // pred_fallthru
      _
    // Predicated region
    $region82: #{tpu_custom_call.1} parent=1 // pred_check
      _
    $region83: #{tpu_custom_call.1} parent=1 // pred_check_branch
      %141 = sbr.rel (0) target = $region85
    $region84: #{tpu_custom_call.1} parent=1 // pred_region
      %142 = dma.done [#allocation6], 1024
    $region85: #{tpu_custom_call.1} parent=1 // pred_fallthru
      _
    // Predicated region
    $region86: #{tpu_custom_call.1} parent=1 // pred_check
      _
    $region87: #{tpu_custom_call.1} parent=1 // pred_check_branch
      %144 = sbr.rel (0) target = $region89
    $region88: #{tpu_custom_call.1} parent=1 // pred_region
      %145 = dma.done [#allocation9], 1024
    $region89: #{tpu_custom_call.1} parent=1 // pred_fallthru
      _
    // Predicated region
    $region90: #{tpu_custom_call.1} parent=1 // pred_check
      _
    $region91: #{tpu_custom_call.1} parent=1 // pred_check_branch
      %147 = sbr.rel (0) target = $region93
    $region92: #{tpu_custom_call.1} parent=1 // pred_region
      %148 = dma.done [#allocation9], 1024
    $region93: #{tpu_custom_call.1} parent=1 // pred_fallthru
      _
    // Predicated region
    $region94: #{tpu_custom_call.1} parent=1 // pred_check
      _
    $region95: #{tpu_custom_call.1} parent=1 // pred_check_branch
      %150 = sbr.rel (0) target = $region97
    $region96: #{tpu_custom_call.1} parent=1 // pred_region
      %151 = dma.done [#allocation12], 1024
    $region97: #{tpu_custom_call.1} parent=1 // pred_fallthru
      _
    // Predicated region
    $region98: #{tpu_custom_call.1} parent=1 // pred_check
      _
    $region99: #{tpu_custom_call.1} parent=1 // pred_check_branch
      %153 = sbr.rel (0) target = $region101
    $region100: #{tpu_custom_call.1} parent=1 // pred_region
      %154 = dma.done [#allocation12], 1024
    $region101: #{tpu_custom_call.1} parent=1 // pred_fallthru
      _
    %v155 = vld [vmem:[#allocation2] sm:$0xff]
    %v156 = vld [vmem:[#allocation2 + $0x8] sm:$0xff]
    %v157 = vld [vmem:[#allocation5] sm:$0xff]
    %v158 = vld [vmem:[#allocation5 + $0x8] sm:$0xff]
    %v159 = vld [vmem:[#allocation5 + $0x10] sm:$0xff]
    %vm160 = vcmask 195584
    %v162 = vsel %vm160, %v155, 0
    %v165 = vsel %vm160, %v156, 0
    %167 = vmatprep.subr.mxu0 0.0
    %168 = vmatpush1.msra.mxu0 %v157
    %169 = vmatprep.subr.mxu0 0.0
    %170 = vmatpush1.msra.mxu0 %v158
    %171 = vmatprep.subr.mxu0 0.0
    %172 = vmatpush1.msra.mxu0 %v159
    %173 = vmatprep.subr.mxu0 0.0
    %174 = vmatpush1.msra.mxu0 0.0
    %175 = vmatprep.subr.mxu0 0.0
    %176 = vmatpush1.msra.mxu0 0.0
    %177 = vmatprep.subr.mxu0 0.0
    %178 = vmatpush1.msra.mxu0 0.0
    %179 = vmatprep.subr.mxu0 0.0
    %180 = vmatpush1.msra.mxu0 0.0
    %181 = vmatprep.subr.mxu0 0.0
    %182 = vmatpush1.msra.mxu0 0.0
    %183 = vmatprep.subr.mxu0 0.0
    %184 = vmatpush1.msra.mxu0 0.0
    %185 = vmatprep.subr.mxu0 0.0
    %186 = vmatpush1.msra.mxu0 0.0
    %187 = vmatprep.subr.mxu0 0.0
    %188 = vmatpush1.msra.mxu0 0.0
    %189 = vmatprep.subr.mxu0 0.0
    %190 = vmatpush1.msra.mxu0 0.0
    %191 = vmatprep.subr.mxu0 0.0
    %192 = vmatpush1.msra.mxu0 0.0
    %193 = vmatprep.subr.mxu0 0.0
    %194 = vmatpush1.msra.mxu0 0.0
    %195 = vmatprep.subr.mxu0 0.0
    %196 = vmatpush1.msra.mxu0 0.0
    %197 = vmatprep.subr.mxu0 0.0
    %198 = vmatpush1.msra.mxu0 0.0
    %199 = vmatprep.subr.mxu0 0.0
    %200 = vmatpush1.msra.mxu0 0.0
    %201 = vmatprep.subr.mxu0 0.0
    %202 = vmatpush1.msra.mxu0 0.0
    %203 = vmatprep.subr.mxu0 0.0
    %204 = vmatpush1.msra.mxu0 0.0
    %205 = vmatprep.subr.mxu0 0.0
    %206 = vmatpush1.msra.mxu0 0.0
    %207 = vmatprep.subr.mxu0 0.0
    %208 = vmatpush1.msra.mxu0 0.0
    %209 = vmatprep.subr.mxu0 0.0
    %210 = vmatpush1.msra.mxu0 0.0
    %211 = vmatprep.subr.mxu0 0.0
    %212 = vmatpush1.msra.mxu0 0.0
    %213 = vmatprep.subr.mxu0 0.0
    %214 = vmatpush1.msra.mxu0 0.0
    %215 = vmatprep.subr.mxu0 0.0
    %216 = vmatpush1.msra.mxu0 0.0
    %217 = vmatprep.subr.mxu0 0.0
    %218 = vmatpush1.msra.mxu0 0.0
    %219 = vmatprep.subr.mxu0 0.0
    %220 = vmatpush1.msra.mxu0 0.0
    %221 = vmatprep.subr.mxu0 0.0
    %222 = vmatpush1.msra.mxu0 0.0
    %223 = vmatprep.subr.mxu0 0.0
    %224 = vmatpush1.msra.mxu0 0.0
    %225 = vmatprep.subr.mxu0 0.0
    %226 = vmatpush1.msra.mxu0 0.0
    %227 = vmatprep.subr.mxu0 0.0
    %228 = vmatpush1.msra.mxu0 0.0
    %229 = vmatprep.subr.mxu0 0.0
    %230 = vmatpush1.msra.mxu0 0.0
    %231 = vmatprep.mubr.f32.mxu0 0.0
    %232 = vmatmul.mubr.f32.gmra.mrb[0].mxu0 %v162
    %v233 = vpop.f32.mrb[0].mxu0
    %v234 = vadd.f32 0.0, %v233
    %v235 = vpop.f32.mrb[0].mxu0
    %236 = vmatprep.mubr.f32.mxu0 0.0
    %237 = vmatmul.mubr.f32.gmra.mrb[0].mxu0 %v165
    %v238 = vpop.f32.mrb[0].mxu0
    %v239 = vadd.f32 0.0, %v238
    %v240 = vpop.f32.mrb[0].mxu0
    %241 = vdwg.mxu0
    %v242 = vld [vmem:[%s2] sm:$0x1]
    %v243 = vld [vmem:[%s3] sm:$0x1]
    %v244 = vmul.f32 %v234, %v234
    %v245 = vmul.f32 %v239, %v239
    %v246 = vadd.f32 %v244, 1e-05
    %v247 = vadd.f32 %v245, 1e-05
    %v248 = vrsqrt.pop %v246
    %v249 = vrsqrt.pop %v247
    %v250 = vmul.f32 %v234, %v248
    %v251 = vmul.f32 %v239, %v249
    %v253 = vlaneseq
    %v254 = vshrl.u32 %v253, 7
    %v255 = vsub.s32 0, %v254
    %v256 = vrot.slane %v242, %v255
    %v258 = vmul.f32 %v250, %v256
    %v259 = vmul.f32 %v251, %v256
    %v261 = vlaneseq
    %v262 = vshrl.u32 %v261, 7
    %v263 = vsub.s32 0, %v262
    %v264 = vrot.slane %v243, %v263
    %v266 = vadd.f32 %v258, %v264
    %v267 = vadd.f32 %v259, %v264
    %v268 = vmax.f32 %v266, 0.0
    %v269 = vmax.f32 %v267, 0.0
    %v270 = vld [vmem:[#allocation7] sm:$0xff]
    %v271 = vld [vmem:[#allocation7 + $0x8] sm:$0xff]
    %v272 = vld [vmem:[#allocation7 + $0x10] sm:$0xff]
    %v273 = vld [vmem:[#allocation7 + $0x18] sm:$0xff]
    %v274 = vld [vmem:[#allocation7 + $0x20] sm:$0xff]
    %v275 = vld [vmem:[#allocation7 + $0x28] sm:$0xff]
    %v276 = vld [vmem:[#allocation7 + $0x30] sm:$0xff]
    %v277 = vld [vmem:[#allocation7 + $0x38] sm:$0xff]
    %vm278 = vcmask 523264
    %v280 = vsel %vm278, %v268, 0
    %v283 = vsel %vm278, %v269, 0
    %285 = vmatprep.subr.mxu0 0.0
    %286 = vmatpush1.msra.mxu0 %v270
    %287 = vmatprep.subr.mxu0 0.0
    %288 = vmatpush1.msra.mxu0 %v271
    %289 = vmatprep.subr.mxu0 0.0
    %290 = vmatpush1.msra.mxu0 %v272
    %291 = vmatprep.subr.mxu0 0.0
    %292 = vmatpush1.msra.mxu0 %v273
    %293 = vmatprep.subr.mxu0 0.0
    %294 = vmatpush1.msra.mxu0 %v274
    %295 = vmatprep.subr.mxu0 0.0
    %296 = vmatpush1.msra.mxu0 %v275
    %297 = vmatprep.subr.mxu0 0.0
    %298 = vmatpush1.msra.mxu0 %v276
    %299 = vmatprep.subr.mxu0 0.0
    %300 = vmatpush1.msra.mxu0 %v277
    %301 = vmatprep.subr.mxu0 0.0
    %302 = vmatpush1.msra.mxu0 0.0
    %303 = vmatprep.subr.mxu0 0.0
    %304 = vmatpush1.msra.mxu0 0.0
    %305 = vmatprep.subr.mxu0 0.0
    %306 = vmatpush1.msra.mxu0 0.0
    %307 = vmatprep.subr.mxu0 0.0
    %308 = vmatpush1.msra.mxu0 0.0
    %309 = vmatprep.subr.mxu0 0.0
    %310 = vmatpush1.msra.mxu0 0.0
    %311 = vmatprep.subr.mxu0 0.0
    %312 = vmatpush1.msra.mxu0 0.0
    %313 = vmatprep.subr.mxu0 0.0
    %314 = vmatpush1.msra.mxu0 0.0
    %315 = vmatprep.subr.mxu0 0.0
    %316 = vmatpush1.msra.mxu0 0.0
    %317 = vmatprep.subr.mxu0 0.0
    %318 = vmatpush1.msra.mxu0 0.0
    %319 = vmatprep.subr.mxu0 0.0
    %320 = vmatpush1.msra.mxu0 0.0
    %321 = vmatprep.subr.mxu0 0.0
    %322 = vmatpush1.msra.mxu0 0.0
    %323 = vmatprep.subr.mxu0 0.0
    %324 = vmatpush1.msra.mxu0 0.0
    %325 = vmatprep.subr.mxu0 0.0
    %326 = vmatpush1.msra.mxu0 0.0
    %327 = vmatprep.subr.mxu0 0.0
    %328 = vmatpush1.msra.mxu0 0.0
    %329 = vmatprep.subr.mxu0 0.0
    %330 = vmatpush1.msra.mxu0 0.0
    %331 = vmatprep.subr.mxu0 0.0
    %332 = vmatpush1.msra.mxu0 0.0
    %333 = vmatprep.subr.mxu0 0.0
    %334 = vmatpush1.msra.mxu0 0.0
    %335 = vmatprep.subr.mxu0 0.0
    %336 = vmatpush1.msra.mxu0 0.0
    %337 = vmatprep.subr.mxu0 0.0
    %338 = vmatpush1.msra.mxu0 0.0
    %339 = vmatprep.subr.mxu0 0.0
    %340 = vmatpush1.msra.mxu0 0.0
    %341 = vmatprep.subr.mxu0 0.0
    %342 = vmatpush1.msra.mxu0 0.0
    %343 = vmatprep.subr.mxu0 0.0
    %344 = vmatpush1.msra.mxu0 0.0
    %345 = vmatprep.subr.mxu0 0.0
    %346 = vmatpush1.msra.mxu0 0.0
    %347 = vmatprep.subr.mxu0 0.0
    %348 = vmatpush1.msra.mxu0 0.0
    %349 = vmatprep.mubr.f32.mxu0 0.0
    %350 = vmatmul.mubr.f32.gmra.mrb[0].mxu0 %v280
    %v351 = vpop.f32.mrb[0].mxu0
    %v352 = vadd.f32 0.0, %v351
    %v353 = vpop.f32.mrb[0].mxu0
    %354 = vmatprep.mubr.f32.mxu0 0.0
    %355 = vmatmul.mubr.f32.gmra.mrb[0].mxu0 %v283
    %v356 = vpop.f32.mrb[0].mxu0
    %v357 = vadd.f32 0.0, %v356
    %v358 = vpop.f32.mrb[0].mxu0
    %359 = vdwg.mxu0
    %v360 = vld [vmem:[%s5] sm:$0x1]
    %v361 = vld [vmem:[%s6] sm:$0x1]
    %v362 = vmul.f32 %v352, %v352
    %v363 = vmul.f32 %v357, %v357
    %v364 = vadd.f32 %v362, 1e-05
    %v365 = vadd.f32 %v363, 1e-05
    %v366 = vrsqrt.pop %v364
    %v367 = vrsqrt.pop %v365
    %v368 = vmul.f32 %v352, %v366
    %v369 = vmul.f32 %v357, %v367
    %v371 = vlaneseq
    %v372 = vshrl.u32 %v371, 7
    %v373 = vsub.s32 0, %v372
    %v374 = vrot.slane %v360, %v373
    %v376 = vmul.f32 %v368, %v374
    %v377 = vmul.f32 %v369, %v374
    %v379 = vlaneseq
    %v380 = vshrl.u32 %v379, 7
    %v381 = vsub.s32 0, %v380
    %v382 = vrot.slane %v361, %v381
    %v384 = vadd.f32 %v376, %v382
    %v385 = vadd.f32 %v377, %v382
    %v386 = vmax.f32 %v384, 0.0
    %v387 = vmax.f32 %v385, 0.0
    %v388 = vld [vmem:[#allocation8] sm:$0xff]
    %v389 = vld [vmem:[#allocation8 + $0x8] sm:$0xff]
    %v390 = vld [vmem:[#allocation8 + $0x10] sm:$0xff]
    %v391 = vld [vmem:[#allocation8 + $0x18] sm:$0xff]
    %v392 = vld [vmem:[#allocation8 + $0x20] sm:$0xff]
    %v393 = vld [vmem:[#allocation8 + $0x28] sm:$0xff]
    %v394 = vld [vmem:[#allocation8 + $0x30] sm:$0xff]
    %v395 = vld [vmem:[#allocation8 + $0x38] sm:$0xff]
    %v397 = vsel %vm278, %v386, 0
    %v400 = vsel %vm278, %v387, 0
    %402 = vmatprep.subr.mxu0 0.0
    %403 = vmatpush1.msra.mxu0 %v388
    %404 = vmatprep.subr.mxu0 0.0
    %405 = vmatpush1.msra.mxu0 %v389
    %406 = vmatprep.subr.mxu0 0.0
    %407 = vmatpush1.msra.mxu0 %v390
    %408 = vmatprep.subr.mxu0 0.0
    %409 = vmatpush1.msra.mxu0 %v391
    %410 = vmatprep.subr.mxu0 0.0
    %411 = vmatpush1.msra.mxu0 %v392
    %412 = vmatprep.subr.mxu0 0.0
    %413 = vmatpush1.msra.mxu0 %v393
    %414 = vmatprep.subr.mxu0 0.0
    %415 = vmatpush1.msra.mxu0 %v394
    %416 = vmatprep.subr.mxu0 0.0
    %417 = vmatpush1.msra.mxu0 %v395
    %418 = vmatprep.subr.mxu0 0.0
    %419 = vmatpush1.msra.mxu0 0.0
    %420 = vmatprep.subr.mxu0 0.0
    %421 = vmatpush1.msra.mxu0 0.0
    %422 = vmatprep.subr.mxu0 0.0
    %423 = vmatpush1.msra.mxu0 0.0
    %424 = vmatprep.subr.mxu0 0.0
    %425 = vmatpush1.msra.mxu0 0.0
    %426 = vmatprep.subr.mxu0 0.0
    %427 = vmatpush1.msra.mxu0 0.0
    %428 = vmatprep.subr.mxu0 0.0
    %429 = vmatpush1.msra.mxu0 0.0
    %430 = vmatprep.subr.mxu0 0.0
    %431 = vmatpush1.msra.mxu0 0.0
    %432 = vmatprep.subr.mxu0 0.0
    %433 = vmatpush1.msra.mxu0 0.0
    %434 = vmatprep.subr.mxu0 0.0
    %435 = vmatpush1.msra.mxu0 0.0
    %436 = vmatprep.subr.mxu0 0.0
    %437 = vmatpush1.msra.mxu0 0.0
    %438 = vmatprep.subr.mxu0 0.0
    %439 = vmatpush1.msra.mxu0 0.0
    %440 = vmatprep.subr.mxu0 0.0
    %441 = vmatpush1.msra.mxu0 0.0
    %442 = vmatprep.subr.mxu0 0.0
    %443 = vmatpush1.msra.mxu0 0.0
    %444 = vmatprep.subr.mxu0 0.0
    %445 = vmatpush1.msra.mxu0 0.0
    %446 = vmatprep.subr.mxu0 0.0
    %447 = vmatpush1.msra.mxu0 0.0
    %448 = vmatprep.subr.mxu0 0.0
    %449 = vmatpush1.msra.mxu0 0.0
    %450 = vmatprep.subr.mxu0 0.0
    %451 = vmatpush1.msra.mxu0 0.0
    %452 = vmatprep.subr.mxu0 0.0
    %453 = vmatpush1.msra.mxu0 0.0
    %454 = vmatprep.subr.mxu0 0.0
    %455 = vmatpush1.msra.mxu0 0.0
    %456 = vmatprep.subr.mxu0 0.0
    %457 = vmatpush1.msra.mxu0 0.0
    %458 = vmatprep.subr.mxu0 0.0
    %459 = vmatpush1.msra.mxu0 0.0
    %460 = vmatprep.subr.mxu0 0.0
    %461 = vmatpush1.msra.mxu0 0.0
    %462 = vmatprep.subr.mxu0 0.0
    %463 = vmatpush1.msra.mxu0 0.0
    %464 = vmatprep.subr.mxu0 0.0
    %465 = vmatpush1.msra.mxu0 0.0
    %466 = vmatprep.mubr.f32.mxu0 0.0
    %467 = vmatmul.mubr.f32.gmra.mrb[0].mxu0 %v397
    %v468 = vpop.f32.mrb[0].mxu0
    %v469 = vadd.f32 0.0, %v468
    %v470 = vpop.f32.mrb[0].mxu0
    %471 = vmatprep.mubr.f32.mxu0 0.0
    %472 = vmatmul.mubr.f32.gmra.mrb[0].mxu0 %v400
    %v473 = vpop.f32.mrb[0].mxu0
    %v474 = vadd.f32 0.0, %v473
    %v475 = vpop.f32.mrb[0].mxu0
    %476 = vdwg.mxu0
    %v477 = vld [vmem:[%s8] sm:$0x1]
    %v478 = vld [vmem:[%s9] sm:$0x1]
    %v479 = vmul.f32 %v469, %v469
    %v480 = vmul.f32 %v474, %v474
    %v481 = vadd.f32 %v479, 1e-05
    %v482 = vadd.f32 %v480, 1e-05
    %v483 = vrsqrt.pop %v481
    %v484 = vrsqrt.pop %v482
    %v485 = vmul.f32 %v469, %v483
    %v486 = vmul.f32 %v474, %v484
    %v488 = vlaneseq
    %v489 = vshrl.u32 %v488, 7
    %v490 = vsub.s32 0, %v489
    %v491 = vrot.slane %v477, %v490
    %v493 = vmul.f32 %v485, %v491
    %v494 = vmul.f32 %v486, %v491
    %v496 = vlaneseq
    %v497 = vshrl.u32 %v496, 7
    %v498 = vsub.s32 0, %v497
    %v499 = vrot.slane %v478, %v498
    %v501 = vadd.f32 %v493, %v499
    %v502 = vadd.f32 %v494, %v499
    %v503 = vmax.f32 %v501, 0.0
    %v504 = vmax.f32 %v502, 0.0
    %v505 = vadd.f32 %v268, %v503
    %v506 = vadd.f32 %v269, %v504
    %v507 = vmul.f32 %v505, 0.70710677
    %v508 = vmul.f32 %v506, 0.70710677
    %v509 = vld [vmem:[#allocation10] sm:$0xff]
    %v510 = vld [vmem:[#allocation10 + $0x8] sm:$0xff]
    %v511 = vld [vmem:[#allocation10 + $0x10] sm:$0xff]
    %v512 = vld [vmem:[#allocation10 + $0x18] sm:$0xff]
    %v513 = vld [vmem:[#allocation10 + $0x20] sm:$0xff]
    %v514 = vld [vmem:[#allocation10 + $0x28] sm:$0xff]
    %v515 = vld [vmem:[#allocation10 + $0x30] sm:$0xff]
    %v516 = vld [vmem:[#allocation10 + $0x38] sm:$0xff]
    %v518 = vsel %vm278, %v507, 0
    %v521 = vsel %vm278, %v508, 0
    %523 = vmatprep.subr.mxu0 0.0
    %524 = vmatpush1.msra.mxu0 %v509
    %525 = vmatprep.subr.mxu0 0.0
    %526 = vmatpush1.msra.mxu0 %v510
    %527 = vmatprep.subr.mxu0 0.0
    %528 = vmatpush1.msra.mxu0 %v511
    %529 = vmatprep.subr.mxu0 0.0
    %530 = vmatpush1.msra.mxu0 %v512
    %531 = vmatprep.subr.mxu0 0.0
    %532 = vmatpush1.msra.mxu0 %v513
    %533 = vmatprep.subr.mxu0 0.0
    %534 = vmatpush1.msra.mxu0 %v514
    %535 = vmatprep.subr.mxu0 0.0
    %536 = vmatpush1.msra.mxu0 %v515
    %537 = vmatprep.subr.mxu0 0.0
    %538 = vmatpush1.msra.mxu0 %v516
    %539 = vmatprep.subr.mxu0 0.0
    %540 = vmatpush1.msra.mxu0 0.0
    %541 = vmatprep.subr.mxu0 0.0
    %542 = vmatpush1.msra.mxu0 0.0
    %543 = vmatprep.subr.mxu0 0.0
    %544 = vmatpush1.msra.mxu0 0.0
    %545 = vmatprep.subr.mxu0 0.0
    %546 = vmatpush1.msra.mxu0 0.0
    %547 = vmatprep.subr.mxu0 0.0
    %548 = vmatpush1.msra.mxu0 0.0
    %549 = vmatprep.subr.mxu0 0.0
    %550 = vmatpush1.msra.mxu0 0.0
    %551 = vmatprep.subr.mxu0 0.0
    %552 = vmatpush1.msra.mxu0 0.0
    %553 = vmatprep.subr.mxu0 0.0
    %554 = vmatpush1.msra.mxu0 0.0
    %555 = vmatprep.subr.mxu0 0.0
    %556 = vmatpush1.msra.mxu0 0.0
    %557 = vmatprep.subr.mxu0 0.0
    %558 = vmatpush1.msra.mxu0 0.0
    %559 = vmatprep.subr.mxu0 0.0
    %560 = vmatpush1.msra.mxu0 0.0
    %561 = vmatprep.subr.mxu0 0.0
    %562 = vmatpush1.msra.mxu0 0.0
    %563 = vmatprep.subr.mxu0 0.0
    %564 = vmatpush1.msra.mxu0 0.0
    %565 = vmatprep.subr.mxu0 0.0
    %566 = vmatpush1.msra.mxu0 0.0
    %567 = vmatprep.subr.mxu0 0.0
    %568 = vmatpush1.msra.mxu0 0.0
    %569 = vmatprep.subr.mxu0 0.0
    %570 = vmatpush1.msra.mxu0 0.0
    %571 = vmatprep.subr.mxu0 0.0
    %572 = vmatpush1.msra.mxu0 0.0
    %573 = vmatprep.subr.mxu0 0.0
    %574 = vmatpush1.msra.mxu0 0.0
    %575 = vmatprep.subr.mxu0 0.0
    %576 = vmatpush1.msra.mxu0 0.0
    %577 = vmatprep.subr.mxu0 0.0
    %578 = vmatpush1.msra.mxu0 0.0
    %579 = vmatprep.subr.mxu0 0.0
    %580 = vmatpush1.msra.mxu0 0.0
    %581 = vmatprep.subr.mxu0 0.0
    %582 = vmatpush1.msra.mxu0 0.0
    %583 = vmatprep.subr.mxu0 0.0
    %584 = vmatpush1.msra.mxu0 0.0
    %585 = vmatprep.subr.mxu0 0.0
    %586 = vmatpush1.msra.mxu0 0.0
    %587 = vmatprep.mubr.f32.mxu0 0.0
    %588 = vmatmul.mubr.f32.gmra.mrb[0].mxu0 %v518
    %v589 = vpop.f32.mrb[0].mxu0
    %v590 = vadd.f32 0.0, %v589
    %v591 = vpop.f32.mrb[0].mxu0
    %592 = vmatprep.mubr.f32.mxu0 0.0
    %593 = vmatmul.mubr.f32.gmra.mrb[0].mxu0 %v521
    %v594 = vpop.f32.mrb[0].mxu0
    %v595 = vadd.f32 0.0, %v594
    %v596 = vpop.f32.mrb[0].mxu0
    %597 = vdwg.mxu0
    %v598 = vld [vmem:[%s11] sm:$0x1]
    %v599 = vld [vmem:[%s12] sm:$0x1]
    %v600 = vmul.f32 %v590, %v590
    %v601 = vmul.f32 %v595, %v595
    %v602 = vadd.f32 %v600, 1e-05
    %v603 = vadd.f32 %v601, 1e-05
    %v604 = vrsqrt.pop %v602
    %v605 = vrsqrt.pop %v603
    %v606 = vmul.f32 %v590, %v604
    %v607 = vmul.f32 %v595, %v605
    %v609 = vlaneseq
    %v610 = vshrl.u32 %v609, 7
    %v611 = vsub.s32 0, %v610
    %v612 = vrot.slane %v598, %v611
    %v614 = vmul.f32 %v606, %v612
    %v615 = vmul.f32 %v607, %v612
    %v617 = vlaneseq
    %v618 = vshrl.u32 %v617, 7
    %v619 = vsub.s32 0, %v618
    %v620 = vrot.slane %v599, %v619
    %v622 = vadd.f32 %v614, %v620
    %v623 = vadd.f32 %v615, %v620
    %v624 = vmax.f32 %v622, 0.0
    %v625 = vmax.f32 %v623, 0.0
    %v626 = vld [vmem:[#allocation11] sm:$0xff]
    %v627 = vld [vmem:[#allocation11 + $0x8] sm:$0xff]
    %v628 = vld [vmem:[#allocation11 + $0x10] sm:$0xff]
    %v629 = vld [vmem:[#allocation11 + $0x18] sm:$0xff]
    %v630 = vld [vmem:[#allocation11 + $0x20] sm:$0xff]
    %v631 = vld [vmem:[#allocation11 + $0x28] sm:$0xff]
    %v632 = vld [vmem:[#allocation11 + $0x30] sm:$0xff]
    %v633 = vld [vmem:[#allocation11 + $0x38] sm:$0xff]
    %v635 = vsel %vm278, %v624, 0
    %v638 = vsel %vm278, %v625, 0
    %640 = vmatprep.subr.mxu0 0.0
    %641 = vmatpush1.msra.mxu0 %v626
    %642 = vmatprep.subr.mxu0 0.0
    %643 = vmatpush1.msra.mxu0 %v627
    %644 = vmatprep.subr.mxu0 0.0
    %645 = vmatpush1.msra.mxu0 %v628
    %646 = vmatprep.subr.mxu0 0.0
    %647 = vmatpush1.msra.mxu0 %v629
    %648 = vmatprep.subr.mxu0 0.0
    %649 = vmatpush1.msra.mxu0 %v630
    %650 = vmatprep.subr.mxu0 0.0
    %651 = vmatpush1.msra.mxu0 %v631
    %652 = vmatprep.subr.mxu0 0.0
    %653 = vmatpush1.msra.mxu0 %v632
    %654 = vmatprep.subr.mxu0 0.0
    %655 = vmatpush1.msra.mxu0 %v633
    %656 = vmatprep.subr.mxu0 0.0
    %657 = vmatpush1.msra.mxu0 0.0
    %658 = vmatprep.subr.mxu0 0.0
    %659 = vmatpush1.msra.mxu0 0.0
    %660 = vmatprep.subr.mxu0 0.0
    %661 = vmatpush1.msra.mxu0 0.0
    %662 = vmatprep.subr.mxu0 0.0
    %663 = vmatpush1.msra.mxu0 0.0
    %664 = vmatprep.subr.mxu0 0.0
    %665 = vmatpush1.msra.mxu0 0.0
    %666 = vmatprep.subr.mxu0 0.0
    %667 = vmatpush1.msra.mxu0 0.0
    %668 = vmatprep.subr.mxu0 0.0
    %669 = vmatpush1.msra.mxu0 0.0
    %670 = vmatprep.subr.mxu0 0.0
    %671 = vmatpush1.msra.mxu0 0.0
    %672 = vmatprep.subr.mxu0 0.0
    %673 = vmatpush1.msra.mxu0 0.0
    %674 = vmatprep.subr.mxu0 0.0
    %675 = vmatpush1.msra.mxu0 0.0
    %676 = vmatprep.subr.mxu0 0.0
    %677 = vmatpush1.msra.mxu0 0.0
    %678 = vmatprep.subr.mxu0 0.0
    %679 = vmatpush1.msra.mxu0 0.0
    %680 = vmatprep.subr.mxu0 0.0
    %681 = vmatpush1.msra.mxu0 0.0
    %682 = vmatprep.subr.mxu0 0.0
    %683 = vmatpush1.msra.mxu0 0.0
    %684 = vmatprep.subr.mxu0 0.0
    %685 = vmatpush1.msra.mxu0 0.0
    %686 = vmatprep.subr.mxu0 0.0
    %687 = vmatpush1.msra.mxu0 0.0
    %688 = vmatprep.subr.mxu0 0.0
    %689 = vmatpush1.msra.mxu0 0.0
    %690 = vmatprep.subr.mxu0 0.0
    %691 = vmatpush1.msra.mxu0 0.0
    %692 = vmatprep.subr.mxu0 0.0
    %693 = vmatpush1.msra.mxu0 0.0
    %694 = vmatprep.subr.mxu0 0.0
    %695 = vmatpush1.msra.mxu0 0.0
    %696 = vmatprep.subr.mxu0 0.0
    %697 = vmatpush1.msra.mxu0 0.0
    %698 = vmatprep.subr.mxu0 0.0
    %699 = vmatpush1.msra.mxu0 0.0
    %700 = vmatprep.subr.mxu0 0.0
    %701 = vmatpush1.msra.mxu0 0.0
    %702 = vmatprep.subr.mxu0 0.0
    %703 = vmatpush1.msra.mxu0 0.0
    %704 = vmatprep.mubr.f32.mxu0 0.0
    %705 = vmatmul.mubr.f32.gmra.mrb[0].mxu0 %v635
    %v706 = vpop.f32.mrb[0].mxu0
    %v707 = vadd.f32 0.0, %v706
    %v708 = vpop.f32.mrb[0].mxu0
    %709 = vmatprep.mubr.f32.mxu0 0.0
    %710 = vmatmul.mubr.f32.gmra.mrb[0].mxu0 %v638
    %v711 = vpop.f32.mrb[0].mxu0
    %v712 = vadd.f32 0.0, %v711
    %v713 = vpop.f32.mrb[0].mxu0
    %714 = vdwg.mxu0
    %v715 = vld [vmem:[%s14] sm:$0x1]
    %v716 = vld [vmem:[%s15] sm:$0x1]
    %v717 = vmul.f32 %v707, %v707
    %v718 = vmul.f32 %v712, %v712
    %v719 = vadd.f32 %v717, 1e-05
    %v720 = vadd.f32 %v718, 1e-05
    %v721 = vrsqrt.pop %v719
    %v722 = vrsqrt.pop %v720
    %v723 = vmul.f32 %v707, %v721
    %v724 = vmul.f32 %v712, %v722
    %v726 = vlaneseq
    %v727 = vshrl.u32 %v726, 7
    %v728 = vsub.s32 0, %v727
    %v729 = vrot.slane %v715, %v728
    %v731 = vmul.f32 %v723, %v729
    %v732 = vmul.f32 %v724, %v729
    %v734 = vlaneseq
    %v735 = vshrl.u32 %v734, 7
    %v736 = vsub.s32 0, %v735
    %v737 = vrot.slane %v716, %v736
    %v739 = vadd.f32 %v731, %v737
    %v740 = vadd.f32 %v732, %v737
    %v741 = vmax.f32 %v739, 0.0
    %v742 = vmax.f32 %v740, 0.0
    %v743 = vadd.f32 %v507, %v741
    %v744 = vadd.f32 %v508, %v742
    %v745 = vmul.f32 %v743, 0.70710677
    %v746 = vmul.f32 %v744, 0.70710677
    %v747 = vld [vmem:[#allocation13] sm:$0xff]
    %v748 = vld [vmem:[#allocation13 + $0x8] sm:$0xff]
    %v749 = vld [vmem:[#allocation13 + $0x10] sm:$0xff]
    %v750 = vld [vmem:[#allocation13 + $0x18] sm:$0xff]
    %v751 = vld [vmem:[#allocation13 + $0x20] sm:$0xff]
    %v752 = vld [vmem:[#allocation13 + $0x28] sm:$0xff]
    %v753 = vld [vmem:[#allocation13 + $0x30] sm:$0xff]
    %v754 = vld [vmem:[#allocation13 + $0x38] sm:$0xff]
    %v755 = vld [vmem:[%s17] sm:$0x1]
    %v757 = vlaneseq
    %v758 = vshrl.u32 %v757, 7
    %v759 = vsub.s32 0, %v758
    %v760 = vrot.slane %v755, %v759
    %v763 = vsel %vm278, %v745, 0
    %v766 = vsel %vm278, %v746, 0
    %768 = vmatprep.subr.mxu0 0.0
    %769 = vmatpush1.msra.mxu0 %v747
    %770 = vmatprep.subr.mxu0 0.0
    %771 = vmatpush1.msra.mxu0 %v748
    %772 = vmatprep.subr.mxu0 0.0
    %773 = vmatpush1.msra.mxu0 %v749
    %774 = vmatprep.subr.mxu0 0.0
    %775 = vmatpush1.msra.mxu0 %v750
    %776 = vmatprep.subr.mxu0 0.0
    %777 = vmatpush1.msra.mxu0 %v751
    %778 = vmatprep.subr.mxu0 0.0
    %779 = vmatpush1.msra.mxu0 %v752
    %780 = vmatprep.subr.mxu0 0.0
    %781 = vmatpush1.msra.mxu0 %v753
    %782 = vmatprep.subr.mxu0 0.0
    %783 = vmatpush1.msra.mxu0 %v754
    %784 = vmatprep.subr.mxu0 0.0
    %785 = vmatpush1.msra.mxu0 0.0
    %786 = vmatprep.subr.mxu0 0.0
    %787 = vmatpush1.msra.mxu0 0.0
    %788 = vmatprep.subr.mxu0 0.0
    %789 = vmatpush1.msra.mxu0 0.0
    %790 = vmatprep.subr.mxu0 0.0
    %791 = vmatpush1.msra.mxu0 0.0
    %792 = vmatprep.subr.mxu0 0.0
    %793 = vmatpush1.msra.mxu0 0.0
    %794 = vmatprep.subr.mxu0 0.0
    %795 = vmatpush1.msra.mxu0 0.0
    %796 = vmatprep.subr.mxu0 0.0
    %797 = vmatpush1.msra.mxu0 0.0
    %798 = vmatprep.subr.mxu0 0.0
    %799 = vmatpush1.msra.mxu0 0.0
    %800 = vmatprep.subr.mxu0 0.0
    %801 = vmatpush1.msra.mxu0 0.0
    %802 = vmatprep.subr.mxu0 0.0
    %803 = vmatpush1.msra.mxu0 0.0
    %804 = vmatprep.subr.mxu0 0.0
    %805 = vmatpush1.msra.mxu0 0.0
    %806 = vmatprep.subr.mxu0 0.0
    %807 = vmatpush1.msra.mxu0 0.0
    %808 = vmatprep.subr.mxu0 0.0
    %809 = vmatpush1.msra.mxu0 0.0
    %810 = vmatprep.subr.mxu0 0.0
    %811 = vmatpush1.msra.mxu0 0.0
    %812 = vmatprep.subr.mxu0 0.0
    %813 = vmatpush1.msra.mxu0 0.0
    %814 = vmatprep.subr.mxu0 0.0
    %815 = vmatpush1.msra.mxu0 0.0
    %816 = vmatprep.subr.mxu0 0.0
    %817 = vmatpush1.msra.mxu0 0.0
    %818 = vmatprep.subr.mxu0 0.0
    %819 = vmatpush1.msra.mxu0 0.0
    %820 = vmatprep.subr.mxu0 0.0
    %821 = vmatpush1.msra.mxu0 0.0
    %822 = vmatprep.subr.mxu0 0.0
    %823 = vmatpush1.msra.mxu0 0.0
    %824 = vmatprep.subr.mxu0 0.0
    %825 = vmatpush1.msra.mxu0 0.0
    %826 = vmatprep.subr.mxu0 0.0
    %827 = vmatpush1.msra.mxu0 0.0
    %828 = vmatprep.subr.mxu0 0.0
    %829 = vmatpush1.msra.mxu0 0.0
    %830 = vmatprep.subr.mxu0 0.0
    %831 = vmatpush1.msra.mxu0 0.0
    %832 = vmatprep.mubr.f32.mxu0 0.0
    %833 = vmatmul.mubr.f32.gmra.mrb[0].mxu0 %v763
    %v834 = vpop.f32.mrb[0].mxu0
    %v835 = vadd.f32 %v760, %v834
    %v836 = vpop.f32.mrb[0].mxu0
    %837 = vmatprep.mubr.f32.mxu0 0.0
    %838 = vmatmul.mubr.f32.gmra.mrb[0].mxu0 %v766
    %v839 = vpop.f32.mrb[0].mxu0
    %v840 = vadd.f32 %v760, %v839
    %v841 = vpop.f32.mrb[0].mxu0
    %842 = vdwg.mxu0
    %843 = vst [vmem:[#allocation14] sm:$0xff] %v835
    %844 = vst [vmem:[#allocation14 + $0x8] sm:$0xff] %v840
    // Predicated region
    $region102: #{tpu_custom_call.1} parent=1 // pred_check
      _
    $region103: #{tpu_custom_call.1} parent=1 // pred_check_branch
      %846 = sbr.rel (0) target = $region105
    $region104: #{tpu_custom_call.1} parent=1 // pred_region
      %s848 = ssub.s32 256, 256
      %849 = vsyncadd [#allocation4], %s848
      %s850 = sshll.u32 [#allocation14], 4
      %s851 = int_to_ptr.vmem [resolvable:$true] %s850
      %856 = dma.vmem_to_hbm [thread:$0]  %s851, 256, %s18, [#allocation4], 128, 128, 8
    $region105: #{tpu_custom_call.1} parent=1 // pred_fallthru
      _
    // Predicated region
    $region106: #{tpu_custom_call.1} parent=1 // pred_check
      _
    $region107: #{tpu_custom_call.1} parent=1 // pred_check_branch
      %858 = sbr.rel (0) target = $region109
    $region108: #{tpu_custom_call.1} parent=1 // pred_region
      %859 = dma.done [#allocation4], 256
    $region109: #{tpu_custom_call.1} parent=1 // pred_fallthru
      _
    %860 = vsyncpa [#allocation3], 1
    %861 = vsyncpa [#allocation6], 1
    %862 = vsyncpa [#allocation9], 1
    %863 = vsyncpa [#allocation12], 1
    %864 = vsyncpa [#allocation4], 1

</llo_original>
